<compile_context>
chip_gen: v7x
topology: tpu7x:2x2x1
jax: 0.10.0
libtpu: 0.0.40
codegen_flags: <defaults>
</compile_context>

<pallas_src>
import functools

import jax
import jax.numpy as jnp
from jax import lax
from jax.experimental import pallas as pl
from jax.experimental.pallas import tpu as pltpu

LANES = 128        # vreg lane width: batch lives here
SUBLANES = 8       # f32 sublane granularity
CHUNK = 8          # (8, 128) = one f32 vreg per inner-loop chunk

# Packed parameter layout (flat f32[46]):
#   [0:5)   w1   (fc1 weight, in=1 -> out=5)
#   [5:10)  b1
#   [10:35) w2   row-major (in j, out k): w2[j,k] at 10 + 5*j + k
#   [35:40) b2
#   [40:45) w3   (fc3 weight, in=5 -> out=1)
#   [45]    b3
_W1, _B1, _W2, _B2, _W3, _B3 = 0, 5, 10, 35, 40, 45
N_PACKED = 46


def _round_up(n, m):
    return ((n + m - 1) // m) * m


def _mlp_math(x, wv):
    """x: (chunk, 128) f32.  wv: list of 46 (chunk, 128) broadcast params."""
    # fc1 (1 -> 5) + ReLU:  h1[j] = relu(x * w1[j] + b1[j])
    h1 = [jnp.maximum(x * wv[_W1 + j] + wv[_B1 + j], 0.0) for j in range(5)]
    # fc2 (5 -> 5) + ReLU:  h2[k] = relu(sum_j h1[j] * w2[j,k] + b2[k])
    h2 = []
    for k in range(5):
        s = h1[0] * wv[_W2 + k]
        for j in range(1, 5):
            s = s + h1[j] * wv[_W2 + 5 * j + k]
        h2.append(jnp.maximum(s + wv[_B2 + k], 0.0))
    # fc3 (5 -> 1):  out = sum_k h2[k] * w3[k] + b3
    out = h2[0] * wv[_W3]
    for k in range(1, 5):
        out = out + h2[k] * wv[_W3 + k]
    return out + wv[_B3]


def _mlp_kernel(w_ref, x_ref, o_ref):
    """w_ref: (46,) f32 in SMEM.  x_ref/o_ref: (tile_rows, 128) f32 in VMEM."""
    nrows = x_ref.shape[0]
    chunk = CHUNK if nrows % CHUNK == 0 else nrows   # tiny full-array blocks
    n_chunks = nrows // chunk

    # Hoist all 46 SMEM scalar reads + lane broadcasts above the chunk loop.
    wv = [jnp.full((chunk, LANES), w_ref[i], jnp.float32)
          for i in range(N_PACKED)]

    if n_chunks == 1:
        o_ref[...] = _mlp_math(x_ref[...], wv).astype(o_ref.dtype)
    else:
        def body(c, carry):
            r = pl.multiple_of(c * chunk, chunk)
            x = x_ref[pl.ds(r, chunk), :]                         # 1 vld
            o_ref[pl.ds(r, chunk), :] = _mlp_math(x, wv).astype(o_ref.dtype)
            return carry                                          # 1 vst
        lax.fori_loop(0, n_chunks, body, 0, unroll=2)


def pack_params(p):
    """Flatten all weights/biases into one f32[46] array (SMEM scalar table)."""
    return jnp.concatenate([
        p["w1"].reshape(-1).astype(jnp.float32),   # (5,)
        p["b1"].reshape(-1).astype(jnp.float32),   # (5,)
        p["w2"].reshape(-1).astype(jnp.float32),   # (25,) row-major (in, out)
        p["b2"].reshape(-1).astype(jnp.float32),   # (5,)
        p["w3"].reshape(-1).astype(jnp.float32),   # (5,)
        p["b3"].reshape(-1).astype(jnp.float32),   # (1,)
    ])


@functools.partial(jax.jit, static_argnames=("tile_rows",))
def custom_net_forward(x, packed_w, tile_rows=None):
    """x: (B, 1) float32.  packed_w: f32[46] from pack_params()."""
    B = x.shape[0]
    x_flat = x.reshape(B).astype(jnp.float32)

    rows = pl.cdiv(B, LANES)
    if B % LANES == 0:
        # Fast path: no pad / slice copies at all.
        rows_pad = rows
        x2d = x_flat.reshape(rows_pad, LANES)
    else:
        # Pad only to 8-row (1024-sample) granularity, never tile granularity.
        rows_pad = _round_up(rows, SUBLANES)
        x2d = jnp.pad(x_flat, (0, rows_pad * LANES - B)).reshape(rows_pad, LANES)

    # Tile selection: multiple of 8, large enough to amortize the ~0.35us
    # per-grid-step overhead, small enough that >=2 grid steps exist when
    # possible so the "parallel" axis shards across both v7x TensorCores.
    if rows_pad % SUBLANES != 0:
        tr = rows_pad                                  # single full-extent block
    elif tile_rows is None:
        tr = min(2048, max(SUBLANES, _round_up(pl.cdiv(rows_pad, 2), SUBLANES)))
    else:
        tr = max(SUBLANES, _round_up(int(tile_rows), SUBLANES))
        tr = min(tr, rows_pad)
    n_tiles = pl.cdiv(rows_pad, tr)                    # last block may be ragged

    out2d = pl.pallas_call(
        _mlp_kernel,
        out_shape=jax.ShapeDtypeStruct((rows_pad, LANES), jnp.float32),
        grid=(n_tiles,),
        in_specs=[
            pl.BlockSpec(memory_space=pltpu.MemorySpace.SMEM),   # packed params
            pl.BlockSpec((tr, LANES), lambda i: (i, 0)),         # x tile
        ],
        out_specs=pl.BlockSpec((tr, LANES), lambda i: (i, 0)),
        compiler_params=pltpu.CompilerParams(
            dimension_semantics=("parallel",)),                  # megacore on v7x
    )(packed_w, x2d)

    if B % LANES == 0:
        return out2d.reshape(B, 1)
    return out2d.reshape(rows_pad * LANES)[:B].reshape(B, 1)


def init_params(key):
    """Deterministic init matching PyTorch Linear shapes (stored as (in, out))."""
    k1, k2, k3, k4, k5, k6 = jax.random.split(key, 6)
    return {
        "w1": jax.random.uniform(k1, (1, 5), jnp.float32, -1.0, 1.0),
        "b1": jax.random.uniform(k2, (1, 5), jnp.float32, -1.0, 1.0),
        "w2": jax.random.uniform(k3, (5, 5), jnp.float32, -0.447, 0.447),
        "b2": jax.random.uniform(k4, (1, 5), jnp.float32, -0.447, 0.447),
        "w3": jax.random.uniform(k5, (5, 1), jnp.float32, -0.447, 0.447),
        "b3": jax.random.uniform(k6, (1, 1), jnp.float32, -0.447, 0.447),
    }


def _reference(x, p):
    h1 = jnp.maximum(x @ p["w1"] + p["b1"], 0.0)
    h2 = jnp.maximum(h1 @ p["w2"] + p["b2"], 0.0)
    return h2 @ p["w3"] + p["b3"]


if __name__ == "__main__":
    key = jax.random.PRNGKey(0)
    kp, kx = jax.random.split(key)
    params = init_params(kp)
    packed = pack_params(params)

    # Exercise every code path:
    #   300  -> pad path, single 8-row block (straight-line kernel body)
    #   384  -> no-pad path, rows=3 (full-extent non-8-multiple block)
    #   4096 -> no-pad path, 2 tiles, in-kernel chunk loop
    #   5000 -> pad path, ragged last grid block, 3-chunk loop
    for B in (300, 384, 4096, 5000):
        x = jax.random.normal(jax.random.fold_in(kx, B), (B, 1), dtype=jnp.float32)
        out = jax.block_until_ready(custom_net_forward(x, packed))
        ref = _reference(x, params)
        assert out.shape == (B, 1)
        assert jnp.allclose(out, ref, atol=1e-5, rtol=1e-5), f"mismatch at B={B}"

    print("KERNEL_OK")
</pallas_src>

<mosaic_0001>
module attributes {stable_mosaic.version = 11 : i64} {
  func.func @_mlp_kernel(%arg0: i32, %arg1: memref<46xf32, #tpu.memory_space<smem>>, %arg2: memref<8x128xf32, #tpu.memory_space<vmem>>, %arg3: memref<8x128xf32, #tpu.memory_space<vmem>>) attributes {dimension_semantics = [#tpu.dimension_semantics<parallel>], iteration_bounds = array<i64: 1>, scalar_prefetch = 0 : i64, scratch_operands = 0 : i64, tpu.core_type = #tpu.core_type<tc>, window_params = [{transform_indices = @transform_0, window_bounds = array<i64: 46>}, {transform_indices = @transform_1, window_bounds = array<i64: 8, 128>}, {transform_indices = @transform_2, window_bounds = array<i64: 8, 128>}]} {
    %c0 = arith.constant 0 : index
    %0 = memref.load %arg1[%c0] : memref<46xf32, #tpu.memory_space<smem>>
    %1 = vector.broadcast %0 : f32 to vector<8x128xf32>
    %c1 = arith.constant 1 : index
    %2 = memref.load %arg1[%c1] : memref<46xf32, #tpu.memory_space<smem>>
    %3 = vector.broadcast %2 : f32 to vector<8x128xf32>
    %c2 = arith.constant 2 : index
    %4 = memref.load %arg1[%c2] : memref<46xf32, #tpu.memory_space<smem>>
    %5 = vector.broadcast %4 : f32 to vector<8x128xf32>
    %c3 = arith.constant 3 : index
    %6 = memref.load %arg1[%c3] : memref<46xf32, #tpu.memory_space<smem>>
    %7 = vector.broadcast %6 : f32 to vector<8x128xf32>
    %c4 = arith.constant 4 : index
    %8 = memref.load %arg1[%c4] : memref<46xf32, #tpu.memory_space<smem>>
    %9 = vector.broadcast %8 : f32 to vector<8x128xf32>
    %c5 = arith.constant 5 : index
    %10 = memref.load %arg1[%c5] : memref<46xf32, #tpu.memory_space<smem>>
    %11 = vector.broadcast %10 : f32 to vector<8x128xf32>
    %c6 = arith.constant 6 : index
    %12 = memref.load %arg1[%c6] : memref<46xf32, #tpu.memory_space<smem>>
    %13 = vector.broadcast %12 : f32 to vector<8x128xf32>
    %c7 = arith.constant 7 : index
    %14 = memref.load %arg1[%c7] : memref<46xf32, #tpu.memory_space<smem>>
    %15 = vector.broadcast %14 : f32 to vector<8x128xf32>
    %c8 = arith.constant 8 : index
    %16 = memref.load %arg1[%c8] : memref<46xf32, #tpu.memory_space<smem>>
    %17 = vector.broadcast %16 : f32 to vector<8x128xf32>
    %c9 = arith.constant 9 : index
    %18 = memref.load %arg1[%c9] : memref<46xf32, #tpu.memory_space<smem>>
    %19 = vector.broadcast %18 : f32 to vector<8x128xf32>
    %c10 = arith.constant 10 : index
    %20 = memref.load %arg1[%c10] : memref<46xf32, #tpu.memory_space<smem>>
    %21 = vector.broadcast %20 : f32 to vector<8x128xf32>
    %c11 = arith.constant 11 : index
    %22 = memref.load %arg1[%c11] : memref<46xf32, #tpu.memory_space<smem>>
    %23 = vector.broadcast %22 : f32 to vector<8x128xf32>
    %c12 = arith.constant 12 : index
    %24 = memref.load %arg1[%c12] : memref<46xf32, #tpu.memory_space<smem>>
    %25 = vector.broadcast %24 : f32 to vector<8x128xf32>
    %c13 = arith.constant 13 : index
    %26 = memref.load %arg1[%c13] : memref<46xf32, #tpu.memory_space<smem>>
    %27 = vector.broadcast %26 : f32 to vector<8x128xf32>
    %c14 = arith.constant 14 : index
    %28 = memref.load %arg1[%c14] : memref<46xf32, #tpu.memory_space<smem>>
    %29 = vector.broadcast %28 : f32 to vector<8x128xf32>
    %c15 = arith.constant 15 : index
    %30 = memref.load %arg1[%c15] : memref<46xf32, #tpu.memory_space<smem>>
    %31 = vector.broadcast %30 : f32 to vector<8x128xf32>
    %c16 = arith.constant 16 : index
    %32 = memref.load %arg1[%c16] : memref<46xf32, #tpu.memory_space<smem>>
    %33 = vector.broadcast %32 : f32 to vector<8x128xf32>
    %c17 = arith.constant 17 : index
    %34 = memref.load %arg1[%c17] : memref<46xf32, #tpu.memory_space<smem>>
    %35 = vector.broadcast %34 : f32 to vector<8x128xf32>
    %c18 = arith.constant 18 : index
    %36 = memref.load %arg1[%c18] : memref<46xf32, #tpu.memory_space<smem>>
    %37 = vector.broadcast %36 : f32 to vector<8x128xf32>
    %c19 = arith.constant 19 : index
    %38 = memref.load %arg1[%c19] : memref<46xf32, #tpu.memory_space<smem>>
    %39 = vector.broadcast %38 : f32 to vector<8x128xf32>
    %c20 = arith.constant 20 : index
    %40 = memref.load %arg1[%c20] : memref<46xf32, #tpu.memory_space<smem>>
    %41 = vector.broadcast %40 : f32 to vector<8x128xf32>
    %c21 = arith.constant 21 : index
    %42 = memref.load %arg1[%c21] : memref<46xf32, #tpu.memory_space<smem>>
    %43 = vector.broadcast %42 : f32 to vector<8x128xf32>
    %c22 = arith.constant 22 : index
    %44 = memref.load %arg1[%c22] : memref<46xf32, #tpu.memory_space<smem>>
    %45 = vector.broadcast %44 : f32 to vector<8x128xf32>
    %c23 = arith.constant 23 : index
    %46 = memref.load %arg1[%c23] : memref<46xf32, #tpu.memory_space<smem>>
    %47 = vector.broadcast %46 : f32 to vector<8x128xf32>
    %c24 = arith.constant 24 : index
    %48 = memref.load %arg1[%c24] : memref<46xf32, #tpu.memory_space<smem>>
    %49 = vector.broadcast %48 : f32 to vector<8x128xf32>
    %c25 = arith.constant 25 : index
    %50 = memref.load %arg1[%c25] : memref<46xf32, #tpu.memory_space<smem>>
    %51 = vector.broadcast %50 : f32 to vector<8x128xf32>
    %c26 = arith.constant 26 : index
    %52 = memref.load %arg1[%c26] : memref<46xf32, #tpu.memory_space<smem>>
    %53 = vector.broadcast %52 : f32 to vector<8x128xf32>
    %c27 = arith.constant 27 : index
    %54 = memref.load %arg1[%c27] : memref<46xf32, #tpu.memory_space<smem>>
    %55 = vector.broadcast %54 : f32 to vector<8x128xf32>
    %c28 = arith.constant 28 : index
    %56 = memref.load %arg1[%c28] : memref<46xf32, #tpu.memory_space<smem>>
    %57 = vector.broadcast %56 : f32 to vector<8x128xf32>
    %c29 = arith.constant 29 : index
    %58 = memref.load %arg1[%c29] : memref<46xf32, #tpu.memory_space<smem>>
    %59 = vector.broadcast %58 : f32 to vector<8x128xf32>
    %c30 = arith.constant 30 : index
    %60 = memref.load %arg1[%c30] : memref<46xf32, #tpu.memory_space<smem>>
    %61 = vector.broadcast %60 : f32 to vector<8x128xf32>
    %c31 = arith.constant 31 : index
    %62 = memref.load %arg1[%c31] : memref<46xf32, #tpu.memory_space<smem>>
    %63 = vector.broadcast %62 : f32 to vector<8x128xf32>
    %c32 = arith.constant 32 : index
    %64 = memref.load %arg1[%c32] : memref<46xf32, #tpu.memory_space<smem>>
    %65 = vector.broadcast %64 : f32 to vector<8x128xf32>
    %c33 = arith.constant 33 : index
    %66 = memref.load %arg1[%c33] : memref<46xf32, #tpu.memory_space<smem>>
    %67 = vector.broadcast %66 : f32 to vector<8x128xf32>
    %c34 = arith.constant 34 : index
    %68 = memref.load %arg1[%c34] : memref<46xf32, #tpu.memory_space<smem>>
    %69 = vector.broadcast %68 : f32 to vector<8x128xf32>
    %c35 = arith.constant 35 : index
    %70 = memref.load %arg1[%c35] : memref<46xf32, #tpu.memory_space<smem>>
    %71 = vector.broadcast %70 : f32 to vector<8x128xf32>
    %c36 = arith.constant 36 : index
    %72 = memref.load %arg1[%c36] : memref<46xf32, #tpu.memory_space<smem>>
    %73 = vector.broadcast %72 : f32 to vector<8x128xf32>
    %c37 = arith.constant 37 : index
    %74 = memref.load %arg1[%c37] : memref<46xf32, #tpu.memory_space<smem>>
    %75 = vector.broadcast %74 : f32 to vector<8x128xf32>
    %c38 = arith.constant 38 : index
    %76 = memref.load %arg1[%c38] : memref<46xf32, #tpu.memory_space<smem>>
    %77 = vector.broadcast %76 : f32 to vector<8x128xf32>
    %c39 = arith.constant 39 : index
    %78 = memref.load %arg1[%c39] : memref<46xf32, #tpu.memory_space<smem>>
    %79 = vector.broadcast %78 : f32 to vector<8x128xf32>
    %c40 = arith.constant 40 : index
    %80 = memref.load %arg1[%c40] : memref<46xf32, #tpu.memory_space<smem>>
    %81 = vector.broadcast %80 : f32 to vector<8x128xf32>
    %c41 = arith.constant 41 : index
    %82 = memref.load %arg1[%c41] : memref<46xf32, #tpu.memory_space<smem>>
    %83 = vector.broadcast %82 : f32 to vector<8x128xf32>
    %c42 = arith.constant 42 : index
    %84 = memref.load %arg1[%c42] : memref<46xf32, #tpu.memory_space<smem>>
    %85 = vector.broadcast %84 : f32 to vector<8x128xf32>
    %c43 = arith.constant 43 : index
    %86 = memref.load %arg1[%c43] : memref<46xf32, #tpu.memory_space<smem>>
    %87 = vector.broadcast %86 : f32 to vector<8x128xf32>
    %c44 = arith.constant 44 : index
    %88 = memref.load %arg1[%c44] : memref<46xf32, #tpu.memory_space<smem>>
    %89 = vector.broadcast %88 : f32 to vector<8x128xf32>
    %c45 = arith.constant 45 : index
    %90 = memref.load %arg1[%c45] : memref<46xf32, #tpu.memory_space<smem>>
    %91 = vector.broadcast %90 : f32 to vector<8x128xf32>
    %c0_0 = arith.constant 0 : index
    %c0_1 = arith.constant 0 : index
    %92 = vector.load %arg2[%c0_0, %c0_1] : memref<8x128xf32, #tpu.memory_space<vmem>>, vector<8x128xf32>
    %93 = arith.mulf %92, %1 : vector<8x128xf32>
    %94 = arith.addf %93, %11 : vector<8x128xf32>
    %cst = arith.constant 0.000000e+00 : f32
    %95 = vector.broadcast %cst : f32 to vector<8x128xf32>
    %96 = arith.maximumf %94, %95 : vector<8x128xf32>
    %97 = arith.mulf %92, %3 : vector<8x128xf32>
    %98 = arith.addf %97, %13 : vector<8x128xf32>
    %cst_2 = arith.constant 0.000000e+00 : f32
    %99 = vector.broadcast %cst_2 : f32 to vector<8x128xf32>
    %100 = arith.maximumf %98, %99 : vector<8x128xf32>
    %101 = arith.mulf %92, %5 : vector<8x128xf32>
    %102 = arith.addf %101, %15 : vector<8x128xf32>
    %cst_3 = arith.constant 0.000000e+00 : f32
    %103 = vector.broadcast %cst_3 : f32 to vector<8x128xf32>
    %104 = arith.maximumf %102, %103 : vector<8x128xf32>
    %105 = arith.mulf %92, %7 : vector<8x128xf32>
    %106 = arith.addf %105, %17 : vector<8x128xf32>
    %cst_4 = arith.constant 0.000000e+00 : f32
    %107 = vector.broadcast %cst_4 : f32 to vector<8x128xf32>
    %108 = arith.maximumf %106, %107 : vector<8x128xf32>
    %109 = arith.mulf %92, %9 : vector<8x128xf32>
    %110 = arith.addf %109, %19 : vector<8x128xf32>
    %cst_5 = arith.constant 0.000000e+00 : f32
    %111 = vector.broadcast %cst_5 : f32 to vector<8x128xf32>
    %112 = arith.maximumf %110, %111 : vector<8x128xf32>
    %113 = arith.mulf %96, %21 : vector<8x128xf32>
    %114 = arith.mulf %100, %31 : vector<8x128xf32>
    %115 = arith.addf %113, %114 : vector<8x128xf32>
    %116 = arith.mulf %104, %41 : vector<8x128xf32>
    %117 = arith.addf %115, %116 : vector<8x128xf32>
    %118 = arith.mulf %108, %51 : vector<8x128xf32>
    %119 = arith.addf %117, %118 : vector<8x128xf32>
    %120 = arith.mulf %112, %61 : vector<8x128xf32>
    %121 = arith.addf %119, %120 : vector<8x128xf32>
    %122 = arith.addf %121, %71 : vector<8x128xf32>
    %cst_6 = arith.constant 0.000000e+00 : f32
    %123 = vector.broadcast %cst_6 : f32 to vector<8x128xf32>
    %124 = arith.maximumf %122, %123 : vector<8x128xf32>
    %125 = arith.mulf %96, %23 : vector<8x128xf32>
    %126 = arith.mulf %100, %33 : vector<8x128xf32>
    %127 = arith.addf %125, %126 : vector<8x128xf32>
    %128 = arith.mulf %104, %43 : vector<8x128xf32>
    %129 = arith.addf %127, %128 : vector<8x128xf32>
    %130 = arith.mulf %108, %53 : vector<8x128xf32>
    %131 = arith.addf %129, %130 : vector<8x128xf32>
    %132 = arith.mulf %112, %63 : vector<8x128xf32>
    %133 = arith.addf %131, %132 : vector<8x128xf32>
    %134 = arith.addf %133, %73 : vector<8x128xf32>
    %cst_7 = arith.constant 0.000000e+00 : f32
    %135 = vector.broadcast %cst_7 : f32 to vector<8x128xf32>
    %136 = arith.maximumf %134, %135 : vector<8x128xf32>
    %137 = arith.mulf %96, %25 : vector<8x128xf32>
    %138 = arith.mulf %100, %35 : vector<8x128xf32>
    %139 = arith.addf %137, %138 : vector<8x128xf32>
    %140 = arith.mulf %104, %45 : vector<8x128xf32>
    %141 = arith.addf %139, %140 : vector<8x128xf32>
    %142 = arith.mulf %108, %55 : vector<8x128xf32>
    %143 = arith.addf %141, %142 : vector<8x128xf32>
    %144 = arith.mulf %112, %65 : vector<8x128xf32>
    %145 = arith.addf %143, %144 : vector<8x128xf32>
    %146 = arith.addf %145, %75 : vector<8x128xf32>
    %cst_8 = arith.constant 0.000000e+00 : f32
    %147 = vector.broadcast %cst_8 : f32 to vector<8x128xf32>
    %148 = arith.maximumf %146, %147 : vector<8x128xf32>
    %149 = arith.mulf %96, %27 : vector<8x128xf32>
    %150 = arith.mulf %100, %37 : vector<8x128xf32>
    %151 = arith.addf %149, %150 : vector<8x128xf32>
    %152 = arith.mulf %104, %47 : vector<8x128xf32>
    %153 = arith.addf %151, %152 : vector<8x128xf32>
    %154 = arith.mulf %108, %57 : vector<8x128xf32>
    %155 = arith.addf %153, %154 : vector<8x128xf32>
    %156 = arith.mulf %112, %67 : vector<8x128xf32>
    %157 = arith.addf %155, %156 : vector<8x128xf32>
    %158 = arith.addf %157, %77 : vector<8x128xf32>
    %cst_9 = arith.constant 0.000000e+00 : f32
    %159 = vector.broadcast %cst_9 : f32 to vector<8x128xf32>
    %160 = arith.maximumf %158, %159 : vector<8x128xf32>
    %161 = arith.mulf %96, %29 : vector<8x128xf32>
    %162 = arith.mulf %100, %39 : vector<8x128xf32>
    %163 = arith.addf %161, %162 : vector<8x128xf32>
    %164 = arith.mulf %104, %49 : vector<8x128xf32>
    %165 = arith.addf %163, %164 : vector<8x128xf32>
    %166 = arith.mulf %108, %59 : vector<8x128xf32>
    %167 = arith.addf %165, %166 : vector<8x128xf32>
    %168 = arith.mulf %112, %69 : vector<8x128xf32>
    %169 = arith.addf %167, %168 : vector<8x128xf32>
    %170 = arith.addf %169, %79 : vector<8x128xf32>
    %cst_10 = arith.constant 0.000000e+00 : f32
    %171 = vector.broadcast %cst_10 : f32 to vector<8x128xf32>
    %172 = arith.maximumf %170, %171 : vector<8x128xf32>
    %173 = arith.mulf %124, %81 : vector<8x128xf32>
    %174 = arith.mulf %136, %83 : vector<8x128xf32>
    %175 = arith.addf %173, %174 : vector<8x128xf32>
    %176 = arith.mulf %148, %85 : vector<8x128xf32>
    %177 = arith.addf %175, %176 : vector<8x128xf32>
    %178 = arith.mulf %160, %87 : vector<8x128xf32>
    %179 = arith.addf %177, %178 : vector<8x128xf32>
    %180 = arith.mulf %172, %89 : vector<8x128xf32>
    %181 = arith.addf %179, %180 : vector<8x128xf32>
    %182 = arith.addf %181, %91 : vector<8x128xf32>
    %c0_11 = arith.constant 0 : index
    %c0_12 = arith.constant 0 : index
    %183 = vector.load %arg3[%c0_11, %c0_12] : memref<8x128xf32, #tpu.memory_space<vmem>>, vector<8x128xf32>
    tpu.vector_store %arg3[%c0_11, %c0_12], %182 {strides = array<i32>} : memref<8x128xf32, #tpu.memory_space<vmem>>, vector<8x128xf32>,
    return
  }
  func.func @transform_0(%arg0: i32) -> i32 {
    %c0_i32 = arith.constant 0 : i32
    %c0_i32_0 = arith.constant 0 : i32
    return %c0_i32 : i32
  }
  func.func @transform_1(%arg0: i32) -> (i32, i32) {
    %c0_i32 = arith.constant 0 : i32
    %c0_i32_0 = arith.constant 0 : i32
    return %arg0, %c0_i32 : i32, i32
  }
  func.func @transform_2(%arg0: i32) -> (i32, i32) {
    %c0_i32 = arith.constant 0 : i32
    %c0_i32_0 = arith.constant 0 : i32
    return %arg0, %c0_i32 : i32, i32
  }
}

</mosaic_0001>

<llo_original>
// kernel: custom_net_forward.1
$region0: #{custom_net_forward.1}
  #allocation0 [shape = 'u32[]', space=smem, size = 0x4, offset = 0x4, fixed_abs, tag = 'smem constant byte address 0x4 - core index']
  #allocation1 [shape = 'u32[144,128]{1,0:T(1,128)}', space=vmem, size = 0x12000, scoped, tag = 'internal scratch']
  %s0 = inlined_call_operand.vmem [shape: f32[46], index: 0, kind: input, shape index: {}]
  %s1 = inlined_call_operand.vmem [shape: f32[8,128], index: 1, kind: input, shape index: {}]
  %s2 = inlined_call_operand.vmem [shape: f32[8,128], index: 2, kind: output, shape index: {}]
  %s3 = sld [smem:[#allocation0]]
  $region22: #{custom_net_forward.1} parent=0
    _
  %s5 = ssub.s32 1, %s3
  %s6 = scalar_select 0, %s5, %s3
  $region1: #{custom_net_forward.1} parent=0
    #allocation2 [shape = 'u8[512]{0}', space=smem, size = 0x200, scoped, tag = 'input window, operand 0, single buffered']
    #allocation3 [shape = 's32[1]{0}', space=sflag, size = 0x4, scoped, tag = 'scoped memory for custom_net_forward.1']
    %7 = vsyncpa [#allocation3], 0
    // Predicated region
    $region2: #{custom_net_forward.1} parent=1 // pred_check
      _
    $region3: #{custom_net_forward.1} parent=1 // pred_check_branch
      %9 = sbr.rel (0) target = $region5
    $region4: #{custom_net_forward.1} parent=1 // pred_region
      %s11 = ssub.s32 16, 16
      %12 = vsyncadd [#allocation3], %s11
      %s14 = sshll.u32 %s0, 4
      %s15 = int_to_ptr.vmem [resolvable:$true] %s14
      %17 = dma.vmem_to_smem %s15, 16, [#allocation2], [#allocation3]
    $region5: #{custom_net_forward.1} parent=1 // pred_fallthru
      _
    // Predicated region
    $region6: #{custom_net_forward.1} parent=1 // pred_check
      _
    $region7: #{custom_net_forward.1} parent=1 // pred_check_branch
      %19 = sbr.rel (0) target = $region9
    $region8: #{custom_net_forward.1} parent=1 // pred_region
      _
    $region9: #{custom_net_forward.1} parent=1 // pred_fallthru
      _
    // Predicated region
    $region10: #{custom_net_forward.1} parent=1 // pred_check
      _
    $region11: #{custom_net_forward.1} parent=1 // pred_check_branch
      %21 = sbr.rel (0) target = $region13
    $region12: #{custom_net_forward.1} parent=1 // pred_region
      %22 = dma.done [#allocation3], 16
    $region13: #{custom_net_forward.1} parent=1 // pred_fallthru
      _
    %23 = sfence
    %s24 = sld [smem:[#allocation2]]
    %v25 = vstv %s24
    %s26 = sld [smem:[#allocation2 + $0x1]]
    %v27 = vstv %s26
    %s28 = sld [smem:[#allocation2 + $0x2]]
    %v29 = vstv %s28
    %s30 = sld [smem:[#allocation2 + $0x3]]
    %v31 = vstv %s30
    %s32 = sld [smem:[#allocation2 + $0x4]]
    %v33 = vstv %s32
    %s34 = sld [smem:[#allocation2 + $0x5]]
    %v35 = vstv %s34
    %s36 = sld [smem:[#allocation2 + $0x6]]
    %v37 = vstv %s36
    %s38 = sld [smem:[#allocation2 + $0x7]]
    %v39 = vstv %s38
    %s40 = sld [smem:[#allocation2 + $0x8]]
    %v41 = vstv %s40
    %s42 = sld [smem:[#allocation2 + $0x9]]
    %v43 = vstv %s42
    %s44 = sld [smem:[#allocation2 + $0xa]]
    %v45 = vstv %s44
    %s46 = sld [smem:[#allocation2 + $0xb]]
    %v47 = vstv %s46
    %s48 = sld [smem:[#allocation2 + $0xc]]
    %v49 = vstv %s48
    %s50 = sld [smem:[#allocation2 + $0xd]]
    %v51 = vstv %s50
    %s52 = sld [smem:[#allocation2 + $0xe]]
    %v53 = vstv %s52
    %s54 = sld [smem:[#allocation2 + $0xf]]
    %v55 = vstv %s54
    %s56 = sld [smem:[#allocation2 + $0x10]]
    %v57 = vstv %s56
    %s58 = sld [smem:[#allocation2 + $0x11]]
    %v59 = vstv %s58
    %s60 = sld [smem:[#allocation2 + $0x12]]
    %v61 = vstv %s60
    %s62 = sld [smem:[#allocation2 + $0x13]]
    %v63 = vstv %s62
    %s64 = sld [smem:[#allocation2 + $0x14]]
    %v65 = vstv %s64
    %s66 = sld [smem:[#allocation2 + $0x15]]
    %v67 = vstv %s66
    %s68 = sld [smem:[#allocation2 + $0x16]]
    %v69 = vstv %s68
    %s70 = sld [smem:[#allocation2 + $0x17]]
    %v71 = vstv %s70
    %s72 = sld [smem:[#allocation2 + $0x18]]
    %v73 = vstv %s72
    %s74 = sld [smem:[#allocation2 + $0x19]]
    %v75 = vstv %s74
    %s76 = sld [smem:[#allocation2 + $0x1a]]
    %v77 = vstv %s76
    %s78 = sld [smem:[#allocation2 + $0x1b]]
    %v79 = vstv %s78
    %s80 = sld [smem:[#allocation2 + $0x1c]]
    %v81 = vstv %s80
    %s82 = sld [smem:[#allocation2 + $0x1d]]
    %v83 = vstv %s82
    %s84 = sld [smem:[#allocation2 + $0x1e]]
    %v85 = vstv %s84
    %s86 = sld [smem:[#allocation2 + $0x1f]]
    %v87 = vstv %s86
    %s88 = sld [smem:[#allocation2 + $0x20]]
    %v89 = vstv %s88
    %s90 = sld [smem:[#allocation2 + $0x21]]
    %v91 = vstv %s90
    %s92 = sld [smem:[#allocation2 + $0x22]]
    %v93 = vstv %s92
    %s94 = sld [smem:[#allocation2 + $0x23]]
    %v95 = vstv %s94
    %s96 = sld [smem:[#allocation2 + $0x24]]
    %v97 = vstv %s96
    %s98 = sld [smem:[#allocation2 + $0x25]]
    %v99 = vstv %s98
    %s100 = sld [smem:[#allocation2 + $0x26]]
    %v101 = vstv %s100
    %s102 = sld [smem:[#allocation2 + $0x27]]
    %v103 = vstv %s102
    %s104 = sld [smem:[#allocation2 + $0x28]]
    %v105 = vstv %s104
    %s106 = sld [smem:[#allocation2 + $0x29]]
    %v107 = vstv %s106
    %s108 = sld [smem:[#allocation2 + $0x2a]]
    %v109 = vstv %s108
    %s110 = sld [smem:[#allocation2 + $0x2b]]
    %v111 = vstv %s110
    %s112 = sld [smem:[#allocation2 + $0x2c]]
    %v113 = vstv %s112
    %s114 = sld [smem:[#allocation2 + $0x2d]]
    %v115 = vstv %s114
    %v116 = vld [vmem:[%s1] sm:$0xff]
    %v117 = vmul.f32 %v116, %v25
    %v118 = vadd.f32 %v117, %v35
    %v119 = vmax.f32 %v118, 0.0
    %v120 = vmul.f32 %v116, %v27
    %v121 = vadd.f32 %v120, %v37
    %v122 = vmax.f32 %v121, 0.0
    %v123 = vmul.f32 %v116, %v29
    %v124 = vadd.f32 %v123, %v39
    %v125 = vmax.f32 %v124, 0.0
    %v126 = vmul.f32 %v116, %v31
    %v127 = vadd.f32 %v126, %v41
    %v128 = vmax.f32 %v127, 0.0
    %v129 = vmul.f32 %v116, %v33
    %v130 = vadd.f32 %v129, %v43
    %v131 = vmax.f32 %v130, 0.0
    %v132 = vmul.f32 %v119, %v45
    %v133 = vmul.f32 %v122, %v55
    %v134 = vadd.f32 %v132, %v133
    %v135 = vmul.f32 %v125, %v65
    %v136 = vadd.f32 %v134, %v135
    %v137 = vmul.f32 %v128, %v75
    %v138 = vadd.f32 %v136, %v137
    %v139 = vmul.f32 %v131, %v85
    %v140 = vadd.f32 %v138, %v139
    %v141 = vadd.f32 %v140, %v95
    %v142 = vmax.f32 %v141, 0.0
    %v143 = vmul.f32 %v119, %v47
    %v144 = vmul.f32 %v122, %v57
    %v145 = vadd.f32 %v143, %v144
    %v146 = vmul.f32 %v125, %v67
    %v147 = vadd.f32 %v145, %v146
    %v148 = vmul.f32 %v128, %v77
    %v149 = vadd.f32 %v147, %v148
    %v150 = vmul.f32 %v131, %v87
    %v151 = vadd.f32 %v149, %v150
    %v152 = vadd.f32 %v151, %v97
    %v153 = vmax.f32 %v152, 0.0
    %v154 = vmul.f32 %v119, %v49
    %v155 = vmul.f32 %v122, %v59
    %v156 = vadd.f32 %v154, %v155
    %v157 = vmul.f32 %v125, %v69
    %v158 = vadd.f32 %v156, %v157
    %v159 = vmul.f32 %v128, %v79
    %v160 = vadd.f32 %v158, %v159
    %v161 = vmul.f32 %v131, %v89
    %v162 = vadd.f32 %v160, %v161
    %v163 = vadd.f32 %v162, %v99
    %v164 = vmax.f32 %v163, 0.0
    %v165 = vmul.f32 %v119, %v51
    %v166 = vmul.f32 %v122, %v61
    %v167 = vadd.f32 %v165, %v166
    %v168 = vmul.f32 %v125, %v71
    %v169 = vadd.f32 %v167, %v168
    %v170 = vmul.f32 %v128, %v81
    %v171 = vadd.f32 %v169, %v170
    %v172 = vmul.f32 %v131, %v91
    %v173 = vadd.f32 %v171, %v172
    %v174 = vadd.f32 %v173, %v101
    %v175 = vmax.f32 %v174, 0.0
    %v176 = vmul.f32 %v119, %v53
    %v177 = vmul.f32 %v122, %v63
    %v178 = vadd.f32 %v176, %v177
    %v179 = vmul.f32 %v125, %v73
    %v180 = vadd.f32 %v178, %v179
    %v181 = vmul.f32 %v128, %v83
    %v182 = vadd.f32 %v180, %v181
    %v183 = vmul.f32 %v131, %v93
    %v184 = vadd.f32 %v182, %v183
    %v185 = vadd.f32 %v184, %v103
    %v186 = vmax.f32 %v185, 0.0
    %v187 = vmul.f32 %v142, %v105
    %v188 = vmul.f32 %v153, %v107
    %v189 = vadd.f32 %v187, %v188
    %v190 = vmul.f32 %v164, %v109
    %v191 = vadd.f32 %v189, %v190
    %v192 = vmul.f32 %v175, %v111
    %v193 = vadd.f32 %v191, %v192
    %v194 = vmul.f32 %v186, %v113
    %v195 = vadd.f32 %v193, %v194
    %v196 = vadd.f32 %v195, %v115
    %197 = vst [vmem:[%s2] sm:$0xff] %v196
    // Predicated region
    $region14: #{custom_net_forward.1} parent=1 // pred_check
      _
    $region15: #{custom_net_forward.1} parent=1 // pred_check_branch
      %199 = sbr.rel (0) target = $region17
    $region16: #{custom_net_forward.1} parent=1 // pred_region
      _
    $region17: #{custom_net_forward.1} parent=1 // pred_fallthru
      _
    // Predicated region
    $region18: #{custom_net_forward.1} parent=1 // pred_check
      _
    $region19: #{custom_net_forward.1} parent=1 // pred_check_branch
      %201 = sbr.rel (0) target = $region21
    $region20: #{custom_net_forward.1} parent=1 // pred_region
      _
    $region21: #{custom_net_forward.1} parent=1 // pred_fallthru
      _
    %202 = vsyncpa [#allocation3], 1

</llo_original>
